<compile_context>
chip_gen: v6e
topology: v6e:2x2x1
jax: 0.10.0
libtpu: 0.0.40
codegen_flags: <defaults>
</compile_context>

<pallas_src>
import jax
import jax.numpy as jnp
from jax.experimental import pallas as pl
from jax.experimental.pallas import tpu as pltpu

SUBLANE = 8     # f32 sublane tile
LANE = 128      # lane tile
HIDDEN = 128


def pgn_kernel(x_ref, w1_ref, b1_ref, w2_ref, b2_ref, o_ref):
    # x_ref: (TB, K_pad), w1_ref: (K_pad, 128), b1_ref: (1, 128)
    # w2_ref: (128, N_pad), b2_ref: (1, N_pad), o_ref: (TB, N_pad) lane-dense.
    x = x_ref[...]
    h = jnp.dot(x, w1_ref[...], preferred_element_type=jnp.float32)   # MXU (TB,128)
    h = jnp.maximum(h + b1_ref[...], 0.0)                             # VPU bias + ReLU
    y = jnp.dot(h, w2_ref[...], preferred_element_type=jnp.float32)   # MXU (TB,N_pad)
    o_ref[...] = y + b2_ref[...]                                      # full-lane store


def _round_up(v, m):
    return ((v + m - 1) // m) * m


def pgn_forward(x, w1, b1, w2, b2, *, block_b=512):
    """x: (B, input_size) f32; w1: (in, 128); b1: (1, 128);
    w2: (128, n_actions); b2: (1, n_actions). Returns (B, n_actions) f32 logits."""
    B, in_dim = x.shape
    hidden = w1.shape[1]
    n_actions = w2.shape[1]

    # --- pad the contraction (feature) dim up to the f32 sublane tile -------
    k_pad = max(SUBLANE, _round_up(in_dim, SUBLANE))
    if k_pad != in_dim:
        x = jnp.pad(x, ((0, 0), (0, k_pad - in_dim)))
        w1 = jnp.pad(w1, ((0, k_pad - in_dim), (0, 0)))

    # --- pad the output dim up to a full 128-lane tile (lane-dense stores) --
    n_pad = max(LANE, _round_up(n_actions, LANE))
    if n_pad != n_actions:
        w2 = jnp.pad(w2, ((0, 0), (0, n_pad - n_actions)))
        b2 = jnp.pad(b2, ((0, 0), (0, n_pad - n_actions)))

    # --- tile the batch axis (parallel grid; single step for tiny B) --------
    tb = min(block_b, max(SUBLANE, _round_up(B, SUBLANE)))
    b_pad = _round_up(B, tb)
    if b_pad != B:
        x = jnp.pad(x, ((0, b_pad - B), (0, 0)))
    n_tiles = b_pad // tb

    flops = 2 * b_pad * (k_pad * hidden + hidden * n_pad)
    bytes_accessed = 4 * (b_pad * k_pad + k_pad * hidden + hidden
                          + hidden * n_pad + n_pad + b_pad * n_pad)

    out = pl.pallas_call(
        pgn_kernel,
        out_shape=jax.ShapeDtypeStruct((b_pad, n_pad), jnp.float32),
        grid=(n_tiles,),
        in_specs=[
            pl.BlockSpec((tb, k_pad), lambda i: (i, 0)),      # x row tile (pipelined)
            pl.BlockSpec((k_pad, hidden), lambda i: (0, 0)),  # w1 (VMEM-resident)
            pl.BlockSpec((1, hidden), lambda i: (0, 0)),      # b1
            pl.BlockSpec((hidden, n_pad), lambda i: (0, 0)),  # w2 (padded, resident)
            pl.BlockSpec((1, n_pad), lambda i: (0, 0)),       # b2 (padded)
        ],
        out_specs=pl.BlockSpec((tb, n_pad), lambda i: (i, 0)),
        compiler_params=pltpu.CompilerParams(
            dimension_semantics=("parallel",)),
        cost_estimate=pl.CostEstimate(flops=flops, transcendentals=0,
                                      bytes_accessed=bytes_accessed),
    )(x, w1, b1, w2, b2)

    # Slice away batch / lane padding outside the kernel.
    return out[:B, :n_actions]


def init_pgn_params(key, input_size, n_actions, hidden=HIDDEN):
    """PyTorch Linear-style init (U[-1/sqrt(fan_in), +1/sqrt(fan_in)]), with
    weights stored transposed: W1 (in, 128), W2 (128, n_actions)."""
    k1, k2, k3, k4 = jax.random.split(key, 4)
    bound1 = 1.0 / jnp.sqrt(jnp.float32(input_size))
    bound2 = 1.0 / jnp.sqrt(jnp.float32(hidden))
    w1 = jax.random.uniform(k1, (input_size, hidden), jnp.float32, -bound1, bound1)
    b1 = jax.random.uniform(k2, (1, hidden), jnp.float32, -bound1, bound1)
    w2 = jax.random.uniform(k3, (hidden, n_actions), jnp.float32, -bound2, bound2)
    b2 = jax.random.uniform(k4, (1, n_actions), jnp.float32, -bound2, bound2)
    return w1, b1, w2, b2


def pgn_reference(x, w1, b1, w2, b2):
    h = jnp.maximum(x @ w1 + b1, 0.0)
    return h @ w2 + b2


if __name__ == "__main__":
    # CartPole-v1: observation dim 4, 2 actions. Small batch of 8 states.
    input_size, n_actions, batch = 4, 2, 8

    key = jax.random.PRNGKey(0)
    kx, kp = jax.random.split(key)
    x = jax.random.normal(kx, (batch, input_size), jnp.float32)
    w1, b1, w2, b2 = init_pgn_params(kp, input_size, n_actions)

    logits = pgn_forward(x, w1, b1, w2, b2)
    logits = jax.block_until_ready(logits)

    ref = pgn_reference(x, w1, b1, w2, b2)
    assert logits.shape == (batch, n_actions)
    assert jnp.allclose(logits, ref, atol=1e-5, rtol=1e-5), "mismatch vs reference"

    # Also sanity-check a larger, non-multiple batch to exercise the grid path.
    xb = jax.random.normal(kx, (1030, input_size), jnp.float32)
    big = jax.block_until_ready(pgn_forward(xb, w1, b1, w2, b2))
    assert big.shape == (1030, n_actions)
    assert jnp.allclose(big, pgn_reference(xb, w1, b1, w2, b2), atol=1e-4, rtol=1e-5)

    print("KERNEL_OK")
</pallas_src>

<mosaic_0001>
module attributes {stable_mosaic.version = 11 : i64} {
  func.func @pgn_kernel(%arg0: i32, %arg1: memref<8x8xf32, #tpu.memory_space<vmem>>, %arg2: memref<8x128xf32, #tpu.memory_space<vmem>>, %arg3: memref<1x128xf32, #tpu.memory_space<vmem>>, %arg4: memref<128x128xf32, #tpu.memory_space<vmem>>, %arg5: memref<1x128xf32, #tpu.memory_space<vmem>>, %arg6: memref<8x128xf32, #tpu.memory_space<vmem>>) attributes {dimension_semantics = [#tpu.dimension_semantics<parallel>], iteration_bounds = array<i64: 1>, scalar_prefetch = 0 : i64, scratch_operands = 0 : i64, tpu.core_type = #tpu.core_type<tc>, window_params = [{transform_indices = @transform_0, window_bounds = array<i64: 8, 8>}, {pipeline_mode = #tpu.pipeline_mode<synchronous>, transform_indices = @transform_1, window_bounds = array<i64: 8, 128>}, {pipeline_mode = #tpu.pipeline_mode<synchronous>, transform_indices = @transform_2, window_bounds = array<i64: 1, 128>}, {pipeline_mode = #tpu.pipeline_mode<synchronous>, transform_indices = @transform_3, window_bounds = array<i64: 128, 128>}, {pipeline_mode = #tpu.pipeline_mode<synchronous>, transform_indices = @transform_4, window_bounds = array<i64: 1, 128>}, {transform_indices = @transform_5, window_bounds = array<i64: 8, 128>}]} {
    %c0 = arith.constant 0 : index
    %c0_0 = arith.constant 0 : index
    %0 = vector.load %arg1[%c0, %c0_0] : memref<8x8xf32, #tpu.memory_space<vmem>>, vector<8x8xf32>
    %c0_1 = arith.constant 0 : index
    %c0_2 = arith.constant 0 : index
    %1 = vector.load %arg2[%c0_1, %c0_2] : memref<8x128xf32, #tpu.memory_space<vmem>>, vector<8x128xf32>
    %cst = arith.constant dense<0.000000e+00> : vector<8x128xf32>
    %2 = tpu.matmul %0, %1, %cst {dimension_numbers = #tpu.dot_dimension_numbers<[1], [0], [0], [1], [0, 0, 1, 1], [], []>} : vector<8x8xf32>, vector<8x128xf32>, vector<8x128xf32> -> vector<8x128xf32>
    %c0_3 = arith.constant 0 : index
    %c0_4 = arith.constant 0 : index
    %3 = vector.load %arg3[%c0_3, %c0_4] : memref<1x128xf32, #tpu.memory_space<vmem>>, vector<1x128xf32>
    %4 = vector.broadcast %3 : vector<1x128xf32> to vector<8x128xf32>
    %5 = arith.addf %2, %4 : vector<8x128xf32>
    %cst_5 = arith.constant 0.000000e+00 : f32
    %6 = vector.broadcast %cst_5 : f32 to vector<8x128xf32>
    %7 = arith.maximumf %5, %6 : vector<8x128xf32>
    %c0_6 = arith.constant 0 : index
    %c0_7 = arith.constant 0 : index
    %8 = vector.load %arg4[%c0_6, %c0_7] : memref<128x128xf32, #tpu.memory_space<vmem>>, vector<128x128xf32>
    %cst_8 = arith.constant dense<0.000000e+00> : vector<8x128xf32>
    %9 = tpu.matmul %7, %8, %cst_8 {dimension_numbers = #tpu.dot_dimension_numbers<[1], [0], [0], [1], [0, 0, 1, 1], [], []>} : vector<8x128xf32>, vector<128x128xf32>, vector<8x128xf32> -> vector<8x128xf32>
    %c0_9 = arith.constant 0 : index
    %c0_10 = arith.constant 0 : index
    %10 = vector.load %arg5[%c0_9, %c0_10] : memref<1x128xf32, #tpu.memory_space<vmem>>, vector<1x128xf32>
    %11 = vector.broadcast %10 : vector<1x128xf32> to vector<8x128xf32>
    %12 = arith.addf %9, %11 : vector<8x128xf32>
    %c0_11 = arith.constant 0 : index
    %c0_12 = arith.constant 0 : index
    %13 = vector.load %arg6[%c0_11, %c0_12] : memref<8x128xf32, #tpu.memory_space<vmem>>, vector<8x128xf32>
    tpu.vector_store %arg6[%c0_11, %c0_12], %12 {strides = array<i32>} : memref<8x128xf32, #tpu.memory_space<vmem>>, vector<8x128xf32>,
    return
  }
  func.func @transform_0(%arg0: i32) -> (i32, i32) {
    %c0_i32 = arith.constant 0 : i32
    %c0_i32_0 = arith.constant 0 : i32
    return %arg0, %c0_i32 : i32, i32
  }
  func.func @transform_1(%arg0: i32) -> (i32, i32) {
    %c0_i32 = arith.constant 0 : i32
    %c0_i32_0 = arith.constant 0 : i32
    %c0_i32_1 = arith.constant 0 : i32
    return %c0_i32, %c0_i32_0 : i32, i32
  }
  func.func @transform_2(%arg0: i32) -> (i32, i32) {
    %c0_i32 = arith.constant 0 : i32
    %c0_i32_0 = arith.constant 0 : i32
    %c0_i32_1 = arith.constant 0 : i32
    return %c0_i32, %c0_i32_0 : i32, i32
  }
  func.func @transform_3(%arg0: i32) -> (i32, i32) {
    %c0_i32 = arith.constant 0 : i32
    %c0_i32_0 = arith.constant 0 : i32
    %c0_i32_1 = arith.constant 0 : i32
    return %c0_i32, %c0_i32_0 : i32, i32
  }
  func.func @transform_4(%arg0: i32) -> (i32, i32) {
    %c0_i32 = arith.constant 0 : i32
    %c0_i32_0 = arith.constant 0 : i32
    %c0_i32_1 = arith.constant 0 : i32
    return %c0_i32, %c0_i32_0 : i32, i32
  }
  func.func @transform_5(%arg0: i32) -> (i32, i32) {
    %c0_i32 = arith.constant 0 : i32
    %c0_i32_0 = arith.constant 0 : i32
    return %arg0, %c0_i32 : i32, i32
  }
}

</mosaic_0001>

<llo_original>
// kernel: tpu_custom_call.1
$region0: #{tpu_custom_call.1}
  #allocation0 [shape = 'u32[]', space=smem, size = 0x4, offset = 0x4, fixed_abs, tag = 'smem constant byte address 0x4 - core index']
  #allocation1 [shape = 'u32[144,128]{1,0:T(1,128)}', space=vmem, size = 0x12000, scoped, tag = 'internal scratch']
  %s0 = inlined_call_operand.hbm [shape: f32[8,8], index: 0, kind: input, shape index: {}]
  %s1 = inlined_call_operand.hbm [shape: f32[8,128], index: 1, kind: input, shape index: {}]
  %s2 = inlined_call_operand.vmem [shape: f32[1,128], index: 2, kind: input, shape index: {}]
  %s3 = inlined_call_operand.hbm [shape: f32[128,128], index: 3, kind: input, shape index: {}]
  %s4 = inlined_call_operand.vmem [shape: f32[1,128], index: 4, kind: input, shape index: {}]
  %s5 = inlined_call_operand.hbm [shape: f32[8,128], index: 5, kind: output, shape index: {}]
  %s6 = sld [smem:[#allocation0]]
  $region42: #{tpu_custom_call.1} parent=0
    _
  %s8 = ssub.s32 1, %s6
  %s9 = scalar_select 0, %s8, %s6
  $region1: #{tpu_custom_call.1} parent=0
    #allocation2 [shape = 'u8[4096]{0}', space=vmem, size = 0x1000, scoped, tag = 'input window, operand 0, single buffered']
    #allocation3 [shape = 's32[1]{0}', space=sflag, size = 0x4, scoped, tag = 'scoped memory for tpu_custom_call.1']
    #allocation4 [shape = 's32[1]{0}', space=sflag, size = 0x4, scoped, tag = 'scoped memory for tpu_custom_call.1']
    #allocation5 [shape = 'u8[4096]{0}', space=vmem, size = 0x1000, scoped, tag = 'input window, operand 1, single buffered']
    #allocation6 [shape = 's32[1]{0}', space=sflag, size = 0x4, scoped, tag = 'scoped memory for tpu_custom_call.1']
    #allocation7 [shape = 'u8[65536]{0}', space=vmem, size = 0x10000, scoped, tag = 'input window, operand 3, single buffered']
    #allocation8 [shape = 'u8[4096]{0}', space=vmem, size = 0x1000, scoped, tag = 'output window, operand 0, single buffered']
    %10 = vsyncpa [#allocation3], 0
    %11 = vsyncpa [#allocation6], 0
    %12 = vsyncpa [#allocation4], 0
    // Predicated region
    $region2: #{tpu_custom_call.1} parent=1 // pred_check
      _
    $region3: #{tpu_custom_call.1} parent=1 // pred_check_branch
      %14 = sbr.rel (0) target = $region5
    $region4: #{tpu_custom_call.1} parent=1 // pred_region
      %s16 = ssub.s32 128, 128
      %17 = vsyncadd [#allocation3], %s16
      %s19 = sshll.u32 [#allocation2], 4
      %s20 = int_to_ptr.vmem [resolvable:$true] %s19
      %22 = dma.hbm_to_vmem [thread:$0]  %s0, 128, %s20, [#allocation3]
    $region5: #{tpu_custom_call.1} parent=1 // pred_fallthru
      _
    // Predicated region
    $region6: #{tpu_custom_call.1} parent=1 // pred_check
      _
    $region7: #{tpu_custom_call.1} parent=1 // pred_check_branch
      %24 = sbr.rel (0) target = $region9
    $region8: #{tpu_custom_call.1} parent=1 // pred_region
      %s26 = ssub.s32 128, 128
      %27 = vsyncadd [#allocation6], %s26
      %s29 = sshll.u32 [#allocation5], 4
      %s30 = int_to_ptr.vmem [resolvable:$true] %s29
      %32 = dma.hbm_to_vmem [thread:$0]  %s1, 128, %s30, [#allocation6]
    $region9: #{tpu_custom_call.1} parent=1 // pred_fallthru
      _
    // Predicated region
    $region10: #{tpu_custom_call.1} parent=1 // pred_check
      _
    $region11: #{tpu_custom_call.1} parent=1 // pred_check_branch
      %34 = sbr.rel (0) target = $region13
    $region12: #{tpu_custom_call.1} parent=1 // pred_region
      _
    $region13: #{tpu_custom_call.1} parent=1 // pred_fallthru
      _
    // Predicated region
    $region14: #{tpu_custom_call.1} parent=1 // pred_check
      _
    $region15: #{tpu_custom_call.1} parent=1 // pred_check_branch
      %36 = sbr.rel (0) target = $region17
    $region16: #{tpu_custom_call.1} parent=1 // pred_region
      %s38 = ssub.s32 2048, 2048
      %39 = vsyncadd [#allocation6], %s38
      %s40 = sshll.u32 [#allocation7], 4
      %s41 = int_to_ptr.vmem [resolvable:$true] %s40
      %46 = dma.hbm_to_vmem [thread:$0]  %s3, 2048, %s41, [#allocation6], 128, 128, 8
    $region17: #{tpu_custom_call.1} parent=1 // pred_fallthru
      _
    // Predicated region
    $region18: #{tpu_custom_call.1} parent=1 // pred_check
      _
    $region19: #{tpu_custom_call.1} parent=1 // pred_check_branch
      %48 = sbr.rel (0) target = $region21
    $region20: #{tpu_custom_call.1} parent=1 // pred_region
      _
    $region21: #{tpu_custom_call.1} parent=1 // pred_fallthru
      _
    // Predicated region
    $region22: #{tpu_custom_call.1} parent=1 // pred_check
      _
    $region23: #{tpu_custom_call.1} parent=1 // pred_check_branch
      %50 = sbr.rel (0) target = $region25
    $region24: #{tpu_custom_call.1} parent=1 // pred_region
      %51 = dma.done [#allocation3], 128
    $region25: #{tpu_custom_call.1} parent=1 // pred_fallthru
      _
    // Predicated region
    $region26: #{tpu_custom_call.1} parent=1 // pred_check
      _
    $region27: #{tpu_custom_call.1} parent=1 // pred_check_branch
      %53 = sbr.rel (0) target = $region29
    $region28: #{tpu_custom_call.1} parent=1 // pred_region
      %54 = dma.done [#allocation6], 128
    $region29: #{tpu_custom_call.1} parent=1 // pred_fallthru
      _
    // Predicated region
    $region30: #{tpu_custom_call.1} parent=1 // pred_check
      _
    $region31: #{tpu_custom_call.1} parent=1 // pred_check_branch
      %56 = sbr.rel (0) target = $region33
    $region32: #{tpu_custom_call.1} parent=1 // pred_region
      %57 = dma.done [#allocation6], 2048
    $region33: #{tpu_custom_call.1} parent=1 // pred_fallthru
      _
    %v58 = vld [vmem:[#allocation2] sm:$0xff]
    %v59 = vld [vmem:[#allocation5] sm:$0xff]
    %v60 = vld [vmem:[%s2] sm:$0x1]
    %v62 = vlaneseq
    %v63 = vshrl.u32 %v62, 7
    %v64 = vsub.s32 0, %v63
    %v65 = vrot.slane %v60, %v64
    %vm67 = vcmask 64512
    %v69 = vsel %vm67, %v58, 0
    %71 = vmatprep.subr.mxu0 0.0
    %72 = vmatpush1.msra.mxu0 0.0
    %73 = vmatprep.subr.mxu0 0.0
    %74 = vmatpush1.msra.mxu0 0.0
    %75 = vmatprep.subr.mxu0 0.0
    %76 = vmatpush1.msra.mxu0 0.0
    %77 = vmatprep.subr.mxu0 0.0
    %78 = vmatpush1.msra.mxu0 0.0
    %79 = vmatprep.subr.mxu0 0.0
    %80 = vmatpush1.msra.mxu0 0.0
    %81 = vmatprep.subr.mxu0 0.0
    %82 = vmatpush1.msra.mxu0 0.0
    %83 = vmatprep.subr.mxu0 0.0
    %84 = vmatpush1.msra.mxu0 0.0
    %85 = vmatprep.subr.mxu0 0.0
    %86 = vmatpush1.msra.mxu0 0.0
    %87 = vmatprep.subr.mxu0 0.0
    %88 = vmatpush1.msra.mxu0 0.0
    %89 = vmatprep.subr.mxu0 0.0
    %90 = vmatpush1.msra.mxu0 0.0
    %91 = vmatprep.subr.mxu0 0.0
    %92 = vmatpush1.msra.mxu0 0.0
    %93 = vmatprep.subr.mxu0 0.0
    %94 = vmatpush1.msra.mxu0 0.0
    %95 = vmatprep.subr.mxu0 0.0
    %96 = vmatpush1.msra.mxu0 0.0
    %97 = vmatprep.subr.mxu0 0.0
    %98 = vmatpush1.msra.mxu0 0.0
    %99 = vmatprep.subr.mxu0 0.0
    %100 = vmatpush1.msra.mxu0 0.0
    %101 = vmatprep.subr.mxu0 0.0
    %102 = vmatpush1.msra.mxu0 %v59
    %103 = vmatprep.subr.mxu0 0.0
    %104 = vmatpush2.msra.mxu0 0.0
    %105 = vmatprep.subr.mxu0 0.0
    %106 = vmatpush2.msra.mxu0 0.0
    %107 = vmatprep.subr.mxu0 0.0
    %108 = vmatpush2.msra.mxu0 0.0
    %109 = vmatprep.subr.mxu0 0.0
    %110 = vmatpush2.msra.mxu0 0.0
    %111 = vmatprep.subr.mxu0 0.0
    %112 = vmatpush2.msra.mxu0 0.0
    %113 = vmatprep.subr.mxu0 0.0
    %114 = vmatpush2.msra.mxu0 0.0
    %115 = vmatprep.subr.mxu0 0.0
    %116 = vmatpush2.msra.mxu0 0.0
    %117 = vmatprep.subr.mxu0 0.0
    %118 = vmatpush2.msra.mxu0 0.0
    %119 = vmatprep.subr.mxu0 0.0
    %120 = vmatpush2.msra.mxu0 0.0
    %121 = vmatprep.subr.mxu0 0.0
    %122 = vmatpush2.msra.mxu0 0.0
    %123 = vmatprep.subr.mxu0 0.0
    %124 = vmatpush2.msra.mxu0 0.0
    %125 = vmatprep.subr.mxu0 0.0
    %126 = vmatpush2.msra.mxu0 0.0
    %127 = vmatprep.subr.mxu0 0.0
    %128 = vmatpush2.msra.mxu0 0.0
    %129 = vmatprep.subr.mxu0 0.0
    %130 = vmatpush2.msra.mxu0 0.0
    %131 = vmatprep.subr.mxu0 0.0
    %132 = vmatpush2.msra.mxu0 0.0
    %133 = vmatprep.subr.mxu0 0.0
    %134 = vmatpush2.msra.mxu0 0.0
    %135 = vmatprep.mubr.f32.mxu0 0.0
    %136 = vmatmul.mubr.f32.gmra.mxu0 %v69
    %v137 = vpop.f32.mrf.mxu0
    %v138 = vadd.f32 %v65, %v137
    %v139 = vpop.f32.mrf.mxu0
    %140 = vdwg.mxu0
    %v141 = vmax.f32 %v138, 0.0
    %v142 = vld [vmem:[#allocation7] sm:$0xff]
    %v143 = vld [vmem:[#allocation7 + $0x8] sm:$0xff]
    %v144 = vld [vmem:[#allocation7 + $0x10] sm:$0xff]
    %v145 = vld [vmem:[#allocation7 + $0x18] sm:$0xff]
    %v146 = vld [vmem:[#allocation7 + $0x20] sm:$0xff]
    %v147 = vld [vmem:[#allocation7 + $0x28] sm:$0xff]
    %v148 = vld [vmem:[#allocation7 + $0x30] sm:$0xff]
    %v149 = vld [vmem:[#allocation7 + $0x38] sm:$0xff]
    %v150 = vld [vmem:[#allocation7 + $0x40] sm:$0xff]
    %v151 = vld [vmem:[#allocation7 + $0x48] sm:$0xff]
    %v152 = vld [vmem:[#allocation7 + $0x50] sm:$0xff]
    %v153 = vld [vmem:[#allocation7 + $0x58] sm:$0xff]
    %v154 = vld [vmem:[#allocation7 + $0x60] sm:$0xff]
    %v155 = vld [vmem:[#allocation7 + $0x68] sm:$0xff]
    %v156 = vld [vmem:[#allocation7 + $0x70] sm:$0xff]
    %v157 = vld [vmem:[#allocation7 + $0x78] sm:$0xff]
    %v158 = vld [vmem:[%s4] sm:$0x1]
    %v160 = vlaneseq
    %v161 = vshrl.u32 %v160, 7
    %v162 = vsub.s32 0, %v161
    %v163 = vrot.slane %v158, %v162
    %165 = vmatprep.subr.mxu0 0.0
    %166 = vmatpush1.msra.mxu0 %v157
    %167 = vmatprep.subr.mxu0 0.0
    %168 = vmatpush1.msra.mxu0 %v156
    %169 = vmatprep.subr.mxu0 0.0
    %170 = vmatpush1.msra.mxu0 %v155
    %171 = vmatprep.subr.mxu0 0.0
    %172 = vmatpush1.msra.mxu0 %v154
    %173 = vmatprep.subr.mxu0 0.0
    %174 = vmatpush1.msra.mxu0 %v153
    %175 = vmatprep.subr.mxu0 0.0
    %176 = vmatpush1.msra.mxu0 %v152
    %177 = vmatprep.subr.mxu0 0.0
    %178 = vmatpush1.msra.mxu0 %v151
    %179 = vmatprep.subr.mxu0 0.0
    %180 = vmatpush1.msra.mxu0 %v150
    %181 = vmatprep.subr.mxu0 0.0
    %182 = vmatpush1.msra.mxu0 %v149
    %183 = vmatprep.subr.mxu0 0.0
    %184 = vmatpush1.msra.mxu0 %v148
    %185 = vmatprep.subr.mxu0 0.0
    %186 = vmatpush1.msra.mxu0 %v147
    %187 = vmatprep.subr.mxu0 0.0
    %188 = vmatpush1.msra.mxu0 %v146
    %189 = vmatprep.subr.mxu0 0.0
    %190 = vmatpush1.msra.mxu0 %v145
    %191 = vmatprep.subr.mxu0 0.0
    %192 = vmatpush1.msra.mxu0 %v144
    %193 = vmatprep.subr.mxu0 0.0
    %194 = vmatpush1.msra.mxu0 %v143
    %195 = vmatprep.subr.mxu0 0.0
    %196 = vmatpush1.msra.mxu0 %v142
    %197 = vmatprep.subr.mxu0 0.0
    %198 = vmatpush2.msra.mxu0 0.0
    %199 = vmatprep.subr.mxu0 0.0
    %200 = vmatpush2.msra.mxu0 0.0
    %201 = vmatprep.subr.mxu0 0.0
    %202 = vmatpush2.msra.mxu0 0.0
    %203 = vmatprep.subr.mxu0 0.0
    %204 = vmatpush2.msra.mxu0 0.0
    %205 = vmatprep.subr.mxu0 0.0
    %206 = vmatpush2.msra.mxu0 0.0
    %207 = vmatprep.subr.mxu0 0.0
    %208 = vmatpush2.msra.mxu0 0.0
    %209 = vmatprep.subr.mxu0 0.0
    %210 = vmatpush2.msra.mxu0 0.0
    %211 = vmatprep.subr.mxu0 0.0
    %212 = vmatpush2.msra.mxu0 0.0
    %213 = vmatprep.subr.mxu0 0.0
    %214 = vmatpush2.msra.mxu0 0.0
    %215 = vmatprep.subr.mxu0 0.0
    %216 = vmatpush2.msra.mxu0 0.0
    %217 = vmatprep.subr.mxu0 0.0
    %218 = vmatpush2.msra.mxu0 0.0
    %219 = vmatprep.subr.mxu0 0.0
    %220 = vmatpush2.msra.mxu0 0.0
    %221 = vmatprep.subr.mxu0 0.0
    %222 = vmatpush2.msra.mxu0 0.0
    %223 = vmatprep.subr.mxu0 0.0
    %224 = vmatpush2.msra.mxu0 0.0
    %225 = vmatprep.subr.mxu0 0.0
    %226 = vmatpush2.msra.mxu0 0.0
    %227 = vmatprep.subr.mxu0 0.0
    %228 = vmatpush2.msra.mxu0 0.0
    %229 = vmatprep.mubr.f32.mxu0 0.0
    %230 = vmatmul.mubr.f32.gmra.mxu0 %v141
    %v231 = vpop.f32.mrf.mxu0
    %v232 = vadd.f32 %v163, %v231
    %v233 = vpop.f32.mrf.mxu0
    %234 = vdwg.mxu0
    %235 = vst [vmem:[#allocation8] sm:$0xff] %v232
    // Predicated region
    $region34: #{tpu_custom_call.1} parent=1 // pred_check
      _
    $region35: #{tpu_custom_call.1} parent=1 // pred_check_branch
      %237 = sbr.rel (0) target = $region37
    $region36: #{tpu_custom_call.1} parent=1 // pred_region
      %s239 = ssub.s32 128, 128
      %240 = vsyncadd [#allocation4], %s239
      %s242 = sshll.u32 [#allocation8], 4
      %s243 = int_to_ptr.vmem [resolvable:$true] %s242
      %245 = dma.vmem_to_hbm [thread:$0]  %s243, 128, %s5, [#allocation4]
    $region37: #{tpu_custom_call.1} parent=1 // pred_fallthru
      _
    // Predicated region
    $region38: #{tpu_custom_call.1} parent=1 // pred_check
      _
    $region39: #{tpu_custom_call.1} parent=1 // pred_check_branch
      %247 = sbr.rel (0) target = $region41
    $region40: #{tpu_custom_call.1} parent=1 // pred_region
      %248 = dma.done [#allocation4], 128
    $region41: #{tpu_custom_call.1} parent=1 // pred_fallthru
      _
    %249 = vsyncpa [#allocation3], 1
    %250 = vsyncpa [#allocation6], 1
    %251 = vsyncpa [#allocation4], 1

</llo_original>
